<compile_context>
chip_gen: v7x
topology: tpu7x:2x2x1
jax: 0.10.0
libtpu: 0.0.40
codegen_flags: <defaults>
</compile_context>

<pallas_src>
import functools

import numpy as np

import jax
import jax.numpy as jnp
from jax import lax
from jax.experimental import pallas as pl
from jax.experimental.pallas import tpu as pltpu


def _paconv_kernel(x_ref, w23_ref, b2_ref, w4_ref, mask_ref, o_ref,
                   *, shifts, cp):
    # x_ref   : (Cp, L)      f32  -- B images folded into lanes, L = B*H*W
    # w23_ref : (2Cp, 9*Cp)  bf16 -- rows [0:Cp]  = k3 taps,
    #                                rows [Cp:2Cp] = k2 in the center-tap cols
    # b2_ref  : (Cp, 1)      f32  -- 1x1 conv bias
    # w4_ref  : (Cp, 9*Cp)   bf16
    # mask_ref: (9*Cp, L)    f32  -- halo masks, pre-broadcast over channels
    #                                and tiled over folded images
    # o_ref   : (Cp, L)      f32
    L = x_ref.shape[-1]

    def tap_slab(plane):
        # Build the 9 shifted copies of `plane` (one per 3x3 tap), zero the
        # halo with one full-slab multiply, cast once to bf16 for the MXU.
        parts = []
        for s in shifts:
            if s == 0:
                parts.append(plane)                      # center tap
            else:
                parts.append(pltpu.roll(plane, shift=(-s) % L, axis=1))
        slab = jnp.concatenate(parts, axis=0)            # (9*Cp, L) f32
        return (slab * mask_ref[...]).astype(jnp.bfloat16)

    x = x_ref[...]
    slab_x = tap_slab(x)

    # ---- fused stage 1: one MXU contraction gives k3(x) and k2(x) ----
    r = jnp.dot(w23_ref[...], slab_x,
                preferred_element_type=jnp.float32)      # (2Cp, L) f32
    k3x = r[:cp, :]
    y = jax.nn.sigmoid(r[cp:, :] + b2_ref[...])          # sigmoid(k2(x) + b)
    t_plane = k3x * y                                    # (Cp, L) f32

    # ---- stage 2: out = k4(t) ----
    out = jnp.dot(w4_ref[...], tap_slab(t_plane),
                  preferred_element_type=jnp.float32)
    o_ref[...] = out.astype(o_ref.dtype)


def _pack_3x3(w, cp):
    # (Cout, Cin, 3, 3) -> (Cp, 9*Cp), column index = (ky*3 + kx)*Cp + ci.
    c = w.shape[0]
    w = jnp.transpose(w, (0, 2, 3, 1))                   # (Cout, kh, kw, Cin)
    w = jnp.pad(w, ((0, cp - c), (0, 0), (0, 0), (0, cp - c)))
    return w.reshape(cp, 9 * cp)


def _tap_masks(H, W):
    # Static halo masks for the 9 taps on the flattened (H*W) plane.
    hw = H * W
    r = np.arange(hw) // W
    c = np.arange(hw) % W
    masks = []
    for dy in (-1, 0, 1):
        for dx in (-1, 0, 1):
            m = (r + dy >= 0) & (r + dy < H) & (c + dx >= 0) & (c + dx < W)
            masks.append(m)
    return np.stack(masks).astype(np.float32)            # (9, H*W)


def paconv_pallas(x, w2, b2, w3, w4):
    """x: (N, C, H, W) f32; weights in PyTorch layout:
       w2 (C, C, 1, 1), b2 (C,), w3/w4 (C, C, 3, 3)."""
    N, C, H, W = x.shape
    HW = H * W
    Cp = ((C + 7) // 8) * 8            # pad channels to a sublane tile

    # Fold the batch into the lane dim (amortizes per-step overhead, widens the
    # MXU N-dim) while keeping >= 2 balanced parallel steps for v7x's 2 TCs.
    if N >= 2 and N % 2 == 0:
        G, B = 2, N // 2
    else:
        G, B = N, 1
    L = B * HW                          # lane extent per grid step

    # ---- inputs: (N, Cp, HW) -> (G, Cp, B*HW), lane = [img0 px | img1 px ...]
    x_p = jnp.pad(x.reshape(N, C, HW), ((0, 0), (0, Cp - C), (0, 0)))
    x_f = x_p.reshape(G, B, Cp, HW).transpose(0, 2, 1, 3).reshape(G, Cp, L)

    # ---- weights: fuse w2 into the center-tap column block of a (2Cp,9Cp) slab
    w3_m = _pack_3x3(w3, Cp)                                     # (Cp, 9Cp)
    w2_m = jnp.pad(w2.reshape(C, C), ((0, Cp - C), (0, Cp - C)))  # (Cp, Cp)
    w2_rows = jnp.zeros((Cp, 9 * Cp), jnp.float32)
    w2_rows = w2_rows.at[:, 4 * Cp:5 * Cp].set(w2_m)             # center tap
    w23_m = jnp.concatenate([w3_m, w2_rows], axis=0).astype(jnp.bfloat16)
    w4_m = _pack_3x3(w4, Cp).astype(jnp.bfloat16)
    b2_m = jnp.pad(b2.reshape(C, 1), ((0, Cp - C), (0, 0)))       # (Cp, 1) f32

    # ---- halo masks, pre-broadcast over channels and tiled over folded images
    masks = _tap_masks(H, W)                                     # (9, HW)
    mask_slab = np.tile(np.repeat(masks, Cp, axis=0), (1, B))    # (9*Cp, L)
    mask_slab = jnp.asarray(mask_slab)

    shifts = tuple(dy * W + dx for dy in (-1, 0, 1) for dx in (-1, 0, 1))
    kernel = functools.partial(_paconv_kernel, shifts=shifts, cp=Cp)

    out_f = pl.pallas_call(
        kernel,
        out_shape=jax.ShapeDtypeStruct((G, Cp, L), x.dtype),
        grid=(G,),
        in_specs=[
            pl.BlockSpec((None, Cp, L), lambda g: (g, 0, 0)),    # x (lane-dense)
            pl.BlockSpec((2 * Cp, 9 * Cp), lambda g: (0, 0)),    # w2|w3 fused
            pl.BlockSpec((Cp, 1), lambda g: (0, 0)),             # b2
            pl.BlockSpec((Cp, 9 * Cp), lambda g: (0, 0)),        # w4
            pl.BlockSpec((9 * Cp, L), lambda g: (0, 0)),         # halo masks
        ],
        out_specs=pl.BlockSpec((None, Cp, L), lambda g: (g, 0, 0)),
        compiler_params=pltpu.CompilerParams(
            dimension_semantics=("parallel",)),
    )(x_f, w23_m, b2_m, w4_m, mask_slab)

    # Unfold: (G, Cp, B*HW) -> (N, C, H, W)
    out = out_f.reshape(G, Cp, B, HW).transpose(0, 2, 1, 3).reshape(N, Cp, HW)
    return out[:, :C, :].reshape(N, C, H, W)
    # TODO(synk): for large H*W add a spatial grid axis with a 1-row halo
    # (budget tap slabs against v7x's 64 MiB VMEM), and for Cp >= 64 switch the
    # concat slab to per-tap MXU accumulation instead of materializing (9Cp, L).
    # TODO(synk): at C=4 two images could be packed into one Cp=8 sublane block
    # with block-diagonal weights to recover the 50% channel-padding waste.


def paconv_ref(x, w2, b2, w3, w4):
    """Pure-JAX reference (matches the PyTorch forward)."""
    dn = ("NCHW", "OIHW", "NCHW")
    prec = lax.Precision.HIGHEST
    y = lax.conv_general_dilated(x, w2, (1, 1), "VALID",
                                 dimension_numbers=dn, precision=prec)
    y = jax.nn.sigmoid(y + b2.reshape(1, -1, 1, 1))
    k3 = lax.conv_general_dilated(x, w3, (1, 1), "SAME",
                                  dimension_numbers=dn, precision=prec)
    out = k3 * y
    out = lax.conv_general_dilated(out, w4, (1, 1), "SAME",
                                   dimension_numbers=dn, precision=prec)
    return out


if __name__ == "__main__":
    nf, k_size = 4, 3
    H, W = 16, 16

    key = jax.random.PRNGKey(0)
    kx, k2w, k2b, k3w, k4w = jax.random.split(key, 5)

    w2 = jax.random.normal(k2w, (nf, nf, 1, 1), dtype=jnp.float32) * 0.2
    b2 = jax.random.normal(k2b, (nf,), dtype=jnp.float32) * 0.1
    w3 = jax.random.normal(k3w, (nf, nf, k_size, k_size), dtype=jnp.float32) * 0.1
    w4 = jax.random.normal(k4w, (nf, nf, k_size, k_size), dtype=jnp.float32) * 0.1

    # Primary case: batch=2 (one image per parallel grid step).
    x2 = jax.random.normal(kx, (2, nf, H, W), dtype=jnp.float32)
    out2 = jax.block_until_ready(paconv_pallas(x2, w2, b2, w3, w4))
    ref2 = jax.block_until_ready(paconv_ref(x2, w2, b2, w3, w4))
    assert out2.shape == (2, nf, H, W)
    err2 = float(jnp.max(jnp.abs(out2 - ref2)))
    # Tolerance sized for bf16 MXU operands with f32 accumulation.
    assert jnp.allclose(out2, ref2, atol=2e-2, rtol=2e-2), f"max abs err {err2}"

    # Seam check: batch=4 exercises the batch-folding path (2 images per step).
    x4 = jax.random.normal(jax.random.PRNGKey(1), (4, nf, H, W),
                           dtype=jnp.float32)
    out4 = jax.block_until_ready(paconv_pallas(x4, w2, b2, w3, w4))
    ref4 = jax.block_until_ready(paconv_ref(x4, w2, b2, w3, w4))
    err4 = float(jnp.max(jnp.abs(out4 - ref4)))
    assert jnp.allclose(out4, ref4, atol=2e-2, rtol=2e-2), f"max abs err {err4}"

    print("KERNEL_OK")
</pallas_src>

<mosaic_0001>
module attributes {stable_mosaic.version = 11 : i64} {
  func.func @_paconv_kernel(%arg0: i32, %arg1: memref<1x8x256xf32, #tpu.memory_space<vmem>>, %arg2: memref<16x72xbf16, #tpu.memory_space<vmem>>, %arg3: memref<8x1xf32, #tpu.memory_space<vmem>>, %arg4: memref<8x72xbf16, #tpu.memory_space<vmem>>, %arg5: memref<72x256xf32, #tpu.memory_space<vmem>>, %arg6: memref<1x8x256xf32, #tpu.memory_space<vmem>>) attributes {dimension_semantics = [#tpu.dimension_semantics<parallel>], iteration_bounds = array<i64: 2>, scalar_prefetch = 0 : i64, scratch_operands = 0 : i64, tpu.core_type = #tpu.core_type<tc>, window_params = [{transform_indices = @transform_0, window_bounds = array<i64: 1, 8, 256>}, {pipeline_mode = #tpu.pipeline_mode<synchronous>, transform_indices = @transform_1, window_bounds = array<i64: 16, 72>}, {pipeline_mode = #tpu.pipeline_mode<synchronous>, transform_indices = @transform_2, window_bounds = array<i64: 8, 1>}, {pipeline_mode = #tpu.pipeline_mode<synchronous>, transform_indices = @transform_3, window_bounds = array<i64: 8, 72>}, {pipeline_mode = #tpu.pipeline_mode<synchronous>, transform_indices = @transform_4, window_bounds = array<i64: 72, 256>}, {transform_indices = @transform_5, window_bounds = array<i64: 1, 8, 256>}]} {
    %c0 = arith.constant 0 : index
    %c0_0 = arith.constant 0 : index
    %c0_1 = arith.constant 0 : index
    %0 = vector.load %arg1[%c0, %c0_0, %c0_1] : memref<1x8x256xf32, #tpu.memory_space<vmem>>, vector<1x8x256xf32>
    %1 = vector.shape_cast %0 : vector<1x8x256xf32> to vector<8x256xf32>
    %c17_i32 = arith.constant 17 : i32
    %2 = tpu.dynamic_rotate %1 by %c17_i32 dim 1 : vector<8x256xf32>, i32 -> vector<8x256xf32>
    %c16_i32 = arith.constant 16 : i32
    %3 = tpu.dynamic_rotate %1 by %c16_i32 dim 1 : vector<8x256xf32>, i32 -> vector<8x256xf32>
    %c15_i32 = arith.constant 15 : i32
    %4 = tpu.dynamic_rotate %1 by %c15_i32 dim 1 : vector<8x256xf32>, i32 -> vector<8x256xf32>
    %c1_i32 = arith.constant 1 : i32
    %5 = tpu.dynamic_rotate %1 by %c1_i32 dim 1 : vector<8x256xf32>, i32 -> vector<8x256xf32>
    %c255_i32 = arith.constant 255 : i32
    %6 = tpu.dynamic_rotate %1 by %c255_i32 dim 1 : vector<8x256xf32>, i32 -> vector<8x256xf32>
    %c241_i32 = arith.constant 241 : i32
    %7 = tpu.dynamic_rotate %1 by %c241_i32 dim 1 : vector<8x256xf32>, i32 -> vector<8x256xf32>
    %c240_i32 = arith.constant 240 : i32
    %8 = tpu.dynamic_rotate %1 by %c240_i32 dim 1 : vector<8x256xf32>, i32 -> vector<8x256xf32>
    %c239_i32 = arith.constant 239 : i32
    %9 = tpu.dynamic_rotate %1 by %c239_i32 dim 1 : vector<8x256xf32>, i32 -> vector<8x256xf32>
    %10 = tpu.concatenate %2, %3, %4, %5, %1, %6, %7, %8, %9 in 0 : vector<8x256xf32>, vector<8x256xf32>, vector<8x256xf32>, vector<8x256xf32>, vector<8x256xf32>, vector<8x256xf32>, vector<8x256xf32>, vector<8x256xf32>, vector<8x256xf32> -> vector<72x256xf32>
    %c0_2 = arith.constant 0 : index
    %c0_3 = arith.constant 0 : index
    %11 = vector.load %arg5[%c0_2, %c0_3] : memref<72x256xf32, #tpu.memory_space<vmem>>, vector<72x256xf32>
    %12 = arith.mulf %10, %11 : vector<72x256xf32>
    %13 = arith.truncf %12 : vector<72x256xf32> to vector<72x256xbf16>
    %c0_4 = arith.constant 0 : index
    %c0_5 = arith.constant 0 : index
    %14 = vector.load %arg2[%c0_4, %c0_5] : memref<16x72xbf16, #tpu.memory_space<vmem>>, vector<16x72xbf16>
    %cst = arith.constant dense<0.000000e+00> : vector<16x256xf32>
    %15 = tpu.matmul %14, %13, %cst {dimension_numbers = #tpu.dot_dimension_numbers<[1], [0], [0], [1], [0, 0, 1, 1], [], []>} : vector<16x72xbf16>, vector<72x256xbf16>, vector<16x256xf32> -> vector<16x256xf32>
    %16 = vector.extract_strided_slice %15 {offsets = [0, 0], sizes = [8, 256], strides = [1, 1]} : vector<16x256xf32> to vector<8x256xf32>
    %17 = vector.extract_strided_slice %15 {offsets = [8, 0], sizes = [8, 256], strides = [1, 1]} : vector<16x256xf32> to vector<8x256xf32>
    %c0_6 = arith.constant 0 : index
    %c0_7 = arith.constant 0 : index
    %18 = vector.load %arg3[%c0_6, %c0_7] : memref<8x1xf32, #tpu.memory_space<vmem>>, vector<8x1xf32>
    %19 = vector.broadcast %18 : vector<8x1xf32> to vector<8x256xf32>
    %20 = arith.addf %17, %19 : vector<8x256xf32>
    %21 = arith.negf %20 : vector<8x256xf32>
    %22 = math.exp %21 : vector<8x256xf32>
    %cst_8 = arith.constant 1.000000e+00 : f32
    %23 = vector.broadcast %cst_8 : f32 to vector<8x256xf32>
    %24 = arith.addf %23, %22 : vector<8x256xf32>
    %25 = arith.divf %23, %24 : vector<8x256xf32>
    %26 = arith.mulf %16, %25 : vector<8x256xf32>
    %c0_9 = arith.constant 0 : index
    %c0_10 = arith.constant 0 : index
    %27 = vector.load %arg4[%c0_9, %c0_10] : memref<8x72xbf16, #tpu.memory_space<vmem>>, vector<8x72xbf16>
    %c17_i32_11 = arith.constant 17 : i32
    %28 = tpu.dynamic_rotate %26 by %c17_i32_11 dim 1 : vector<8x256xf32>, i32 -> vector<8x256xf32>
    %c16_i32_12 = arith.constant 16 : i32
    %29 = tpu.dynamic_rotate %26 by %c16_i32_12 dim 1 : vector<8x256xf32>, i32 -> vector<8x256xf32>
    %c15_i32_13 = arith.constant 15 : i32
    %30 = tpu.dynamic_rotate %26 by %c15_i32_13 dim 1 : vector<8x256xf32>, i32 -> vector<8x256xf32>
    %c1_i32_14 = arith.constant 1 : i32
    %31 = tpu.dynamic_rotate %26 by %c1_i32_14 dim 1 : vector<8x256xf32>, i32 -> vector<8x256xf32>
    %c255_i32_15 = arith.constant 255 : i32
    %32 = tpu.dynamic_rotate %26 by %c255_i32_15 dim 1 : vector<8x256xf32>, i32 -> vector<8x256xf32>
    %c241_i32_16 = arith.constant 241 : i32
    %33 = tpu.dynamic_rotate %26 by %c241_i32_16 dim 1 : vector<8x256xf32>, i32 -> vector<8x256xf32>
    %c240_i32_17 = arith.constant 240 : i32
    %34 = tpu.dynamic_rotate %26 by %c240_i32_17 dim 1 : vector<8x256xf32>, i32 -> vector<8x256xf32>
    %c239_i32_18 = arith.constant 239 : i32
    %35 = tpu.dynamic_rotate %26 by %c239_i32_18 dim 1 : vector<8x256xf32>, i32 -> vector<8x256xf32>
    %36 = tpu.concatenate %28, %29, %30, %31, %26, %32, %33, %34, %35 in 0 : vector<8x256xf32>, vector<8x256xf32>, vector<8x256xf32>, vector<8x256xf32>, vector<8x256xf32>, vector<8x256xf32>, vector<8x256xf32>, vector<8x256xf32>, vector<8x256xf32> -> vector<72x256xf32>
    %c0_19 = arith.constant 0 : index
    %c0_20 = arith.constant 0 : index
    %37 = vector.load %arg5[%c0_19, %c0_20] : memref<72x256xf32, #tpu.memory_space<vmem>>, vector<72x256xf32>
    %38 = arith.mulf %36, %37 : vector<72x256xf32>
    %39 = arith.truncf %38 : vector<72x256xf32> to vector<72x256xbf16>
    %cst_21 = arith.constant dense<0.000000e+00> : vector<8x256xf32>
    %40 = tpu.matmul %27, %39, %cst_21 {dimension_numbers = #tpu.dot_dimension_numbers<[1], [0], [0], [1], [0, 0, 1, 1], [], []>} : vector<8x72xbf16>, vector<72x256xbf16>, vector<8x256xf32> -> vector<8x256xf32>
    %c0_22 = arith.constant 0 : index
    %c0_23 = arith.constant 0 : index
    %c0_24 = arith.constant 0 : index
    %41 = vector.load %arg6[%c0_22, %c0_23, %c0_24] : memref<1x8x256xf32, #tpu.memory_space<vmem>>, vector<1x8x256xf32>
    %42 = vector.shape_cast %41 : vector<1x8x256xf32> to vector<8x256xf32>
    %43 = vector.shape_cast %40 : vector<8x256xf32> to vector<1x8x256xf32>
    tpu.vector_store %arg6[%c0_22, %c0_23, %c0_24], %43 {strides = array<i32>} : memref<1x8x256xf32, #tpu.memory_space<vmem>>, vector<1x8x256xf32>,
    return
  }
  func.func @transform_0(%arg0: i32) -> (i32, i32, i32) {
    %c0_i32 = arith.constant 0 : i32
    %c0_i32_0 = arith.constant 0 : i32
    %c0_i32_1 = arith.constant 0 : i32
    return %arg0, %c0_i32, %c0_i32_0 : i32, i32, i32
  }
  func.func @transform_1(%arg0: i32) -> (i32, i32) {
    %c0_i32 = arith.constant 0 : i32
    %c0_i32_0 = arith.constant 0 : i32
    %c0_i32_1 = arith.constant 0 : i32
    return %c0_i32, %c0_i32_0 : i32, i32
  }
  func.func @transform_2(%arg0: i32) -> (i32, i32) {
    %c0_i32 = arith.constant 0 : i32
    %c0_i32_0 = arith.constant 0 : i32
    %c0_i32_1 = arith.constant 0 : i32
    return %c0_i32, %c0_i32_0 : i32, i32
  }
  func.func @transform_3(%arg0: i32) -> (i32, i32) {
    %c0_i32 = arith.constant 0 : i32
    %c0_i32_0 = arith.constant 0 : i32
    %c0_i32_1 = arith.constant 0 : i32
    return %c0_i32, %c0_i32_0 : i32, i32
  }
  func.func @transform_4(%arg0: i32) -> (i32, i32) {
    %c0_i32 = arith.constant 0 : i32
    %c0_i32_0 = arith.constant 0 : i32
    %c0_i32_1 = arith.constant 0 : i32
    return %c0_i32, %c0_i32_0 : i32, i32
  }
  func.func @transform_5(%arg0: i32) -> (i32, i32, i32) {
    %c0_i32 = arith.constant 0 : i32
    %c0_i32_0 = arith.constant 0 : i32
    %c0_i32_1 = arith.constant 0 : i32
    return %arg0, %c0_i32, %c0_i32_0 : i32, i32, i32
  }
}

</mosaic_0001>

<llo_original>
// kernel: tpu_custom_call.1
$region0: #{tpu_custom_call.1}
  #allocation0 [shape = 'u32[]', space=smem, size = 0x4, offset = 0x4, fixed_abs, tag = 'smem constant byte address 0x4 - core index']
  #allocation1 [shape = 'u32[144,128]{1,0:T(1,128)}', space=vmem, size = 0x12000, scoped, tag = 'internal scratch']
  %s0 = inlined_call_operand.hbm [shape: f32[2,8,256], index: 0, kind: input, shape index: {}]
  %s1 = inlined_call_operand.vmem [shape: bf16[16,72], index: 1, kind: input, shape index: {}]
  %s2 = inlined_call_operand.vmem [shape: f32[8,1], index: 2, kind: input, shape index: {}]
  %s3 = inlined_call_operand.vmem [shape: bf16[8,72], index: 3, kind: input, shape index: {}]
  %s4 = inlined_call_operand.hbm [shape: f32[72,256], index: 4, kind: input, shape index: {}]
  %s5 = inlined_call_operand.hbm [shape: f32[2,8,256], index: 5, kind: output, shape index: {}]
  %s6 = sld [smem:[#allocation0]]
  $region61: #{tpu_custom_call.1} parent=0
    _
  %s8 = ssub.s32 1, %s6
  %s9 = scalar_select 0, %s8, %s6
  $region1: #{tpu_custom_call.1} parent=0
    #allocation2 [shape = 'u8[16384]{0}', space=vmem, size = 0x4000, scoped, tag = 'input window, operand 0']
    #allocation3 [shape = 's32[2]{0}', space=sflag, size = 0x8, scoped, tag = 'scoped memory for tpu_custom_call.1']
    #allocation4 [shape = 's32[2]{0}', space=sflag, size = 0x8, scoped, tag = 'scoped memory for tpu_custom_call.1']
    #allocation5 [shape = 'u8[73728]{0}', space=vmem, size = 0x12000, scoped, tag = 'input window, operand 4, single buffered']
    #allocation6 [shape = 's32[1]{0}', space=sflag, size = 0x4, scoped, tag = 'scoped memory for tpu_custom_call.1']
    #allocation7 [shape = 'u8[16384]{0}', space=vmem, size = 0x4000, scoped, tag = 'output window, operand 0']
    %10 = vsyncpa [#allocation3], 0
    %s11 = scalar_lea.sflag [#allocation3], 1
    %12 = vsyncpa %s11, 0
    %13 = vsyncpa [#allocation6], 0
    %14 = vsyncpa [#allocation4], 0
    %s15 = scalar_lea.sflag [#allocation4], 1
    %16 = vsyncpa %s15, 0
    loop: start=0, step=1, limit=4
    $region2: #{tpu_custom_call.1} parent=1 // loop_pre_header
      _
    $region3: #{tpu_custom_call.1} parent=1 // loop_header
      %s18 = sphi 0, %s22
      %p19 = scmp.ge.s32.totalorder %s18, 4
      %s28 = sphi 0, %s30
      %s31 = sphi 0, %s28
      %s32 = sphi 0, %s31
      %s48 = sphi 0, %s32
      %s52 = sphi 0, %s52
      %s54 = sphi 0, %s52
      %s55 = sphi 0, %s54
      %s69 = sphi 0, %s55
      %s73 = sphi 0, %s73
      %s75 = sphi 0, %s73
      %s76 = sphi 0, %s75
      %s90 = sphi 0, %s76
      %s94 = sphi 0, %s94
      %s96 = sphi 0, %s94
      %s97 = sphi 0, %s96
      %s111 = sphi 0, %s97
      %s115 = sphi 0, %s115
      %s117 = sphi 0, %s115
      %s118 = sphi 0, %s117
      %s132 = sphi 0, %s118
      %s138 = sphi 0, %s140
      %s141 = sphi 0, %s138
      %s142 = sphi 0, %s141
      %s158 = sphi 0, %s142
    $region4: #{tpu_custom_call.1} parent=1 // loop_header_branch
      %21 = sbr.rel (%p19) target = $region8
    $region5: #{tpu_custom_call.1} parent=1 // loop_body
      %s23 = ssub.s32 %s18, 1
      %s24 = ssub.s32 %s18, 2
      %s25 = sadd.s32 %s18, 1
      %s26 = ssub.s32 %s18, %s25
      %p27 = scmp.eq.s32.totalorder %s26, 0
      %s29 = sadd.s32 %s28, 1
      %s30 = scalar_select %p27, %s28, %s29
      %p33 = pneg %p27
      %p34 = scmp.eq.s32.totalorder %s18, 1
      %p35 = por %p33, %p34
      %p36 = scmp.ne.s32.totalorder %s28, %s31
      %p37 = scmp.eq.s32.totalorder %s18, 0
      %p38 = por %p36, %p37
      %p39 = scmp.ne.s32.totalorder %s28, %s31
      %p40 = scmp.eq.s32.totalorder %s23, 1
      %p41 = por %p39, %p40
      %p42 = scmp.ne.s32.totalorder %s31, %s32
      %p43 = scmp.eq.s32.totalorder %s23, 0
      %p44 = por %p42, %p43
      %p45 = scmp.ne.s32.totalorder %s31, %s32
      %p46 = scmp.eq.s32.totalorder %s24, 1
      %p47 = por %p45, %p46
      %p49 = scmp.ne.s32.totalorder %s32, %s48
      %p50 = scmp.eq.s32.totalorder %s24, 0
      %p51 = por %p49, %p50
      %s53 = sadd.s32 %s52, 1
      %p56 = scmp.eq.s32.totalorder %s18, 1
      %p57 = scmp.ne.s32.totalorder %s52, %s54
      %p58 = scmp.eq.s32.totalorder %s18, 0
      %p59 = por %p57, %p58
      %p60 = scmp.ne.s32.totalorder %s52, %s54
      %p61 = scmp.eq.s32.totalorder %s23, 1
      %p62 = por %p60, %p61
      %p63 = scmp.ne.s32.totalorder %s54, %s55
      %p64 = scmp.eq.s32.totalorder %s23, 0
      %p65 = por %p63, %p64
      %p66 = scmp.ne.s32.totalorder %s54, %s55
      %p67 = scmp.eq.s32.totalorder %s24, 1
      %p68 = por %p66, %p67
      %p70 = scmp.ne.s32.totalorder %s55, %s69
      %p71 = scmp.eq.s32.totalorder %s24, 0
      %p72 = por %p70, %p71
      %s74 = sadd.s32 %s73, 1
      %p77 = scmp.eq.s32.totalorder %s18, 1
      %p78 = scmp.ne.s32.totalorder %s73, %s75
      %p79 = scmp.eq.s32.totalorder %s18, 0
      %p80 = por %p78, %p79
      %p81 = scmp.ne.s32.totalorder %s73, %s75
      %p82 = scmp.eq.s32.totalorder %s23, 1
      %p83 = por %p81, %p82
      %p84 = scmp.ne.s32.totalorder %s75, %s76
      %p85 = scmp.eq.s32.totalorder %s23, 0
      %p86 = por %p84, %p85
      %p87 = scmp.ne.s32.totalorder %s75, %s76
      %p88 = scmp.eq.s32.totalorder %s24, 1
      %p89 = por %p87, %p88
      %p91 = scmp.ne.s32.totalorder %s76, %s90
      %p92 = scmp.eq.s32.totalorder %s24, 0
      %p93 = por %p91, %p92
      %s95 = sadd.s32 %s94, 1
      %p98 = scmp.eq.s32.totalorder %s18, 1
      %p99 = scmp.ne.s32.totalorder %s94, %s96
      %p100 = scmp.eq.s32.totalorder %s18, 0
      %p101 = por %p99, %p100
      %p102 = scmp.ne.s32.totalorder %s94, %s96
      %p103 = scmp.eq.s32.totalorder %s23, 1
      %p104 = por %p102, %p103
      %p105 = scmp.ne.s32.totalorder %s96, %s97
      %p106 = scmp.eq.s32.totalorder %s23, 0
      %p107 = por %p105, %p106
      %p108 = scmp.ne.s32.totalorder %s96, %s97
      %p109 = scmp.eq.s32.totalorder %s24, 1
      %p110 = por %p108, %p109
      %p112 = scmp.ne.s32.totalorder %s97, %s111
      %p113 = scmp.eq.s32.totalorder %s24, 0
      %p114 = por %p112, %p113
      %s116 = sadd.s32 %s115, 1
      %p119 = scmp.eq.s32.totalorder %s18, 1
      %p120 = scmp.ne.s32.totalorder %s115, %s117
      %p121 = scmp.eq.s32.totalorder %s18, 0
      %p122 = por %p120, %p121
      %p123 = scmp.ne.s32.totalorder %s115, %s117
      %p124 = scmp.eq.s32.totalorder %s23, 1
      %p125 = por %p123, %p124
      %p126 = scmp.ne.s32.totalorder %s117, %s118
      %p127 = scmp.eq.s32.totalorder %s23, 0
      %p128 = por %p126, %p127
      %p129 = scmp.ne.s32.totalorder %s117, %s118
      %p130 = scmp.eq.s32.totalorder %s24, 1
      %p131 = por %p129, %p130
      %p133 = scmp.ne.s32.totalorder %s118, %s132
      %p134 = scmp.eq.s32.totalorder %s24, 0
      %p135 = por %p133, %p134
      %s136 = ssub.s32 %s18, %s25
      %p137 = scmp.eq.s32.totalorder %s136, 0
      %s139 = sadd.s32 %s138, 1
      %s140 = scalar_select %p137, %s138, %s139
      %p143 = pneg %p137
      %p144 = scmp.eq.s32.totalorder %s18, 1
      %p145 = por %p143, %p144
      %p146 = scmp.ne.s32.totalorder %s138, %s141
      %p147 = scmp.eq.s32.totalorder %s18, 0
      %p148 = por %p146, %p147
      %p149 = scmp.ne.s32.totalorder %s138, %s141
      %p150 = scmp.eq.s32.totalorder %s23, 1
      %p151 = por %p149, %p150
      %p152 = scmp.ne.s32.totalorder %s141, %s142
      %p153 = scmp.eq.s32.totalorder %s23, 0
      %p154 = por %p152, %p153
      %p155 = scmp.ne.s32.totalorder %s141, %s142
      %p156 = scmp.eq.s32.totalorder %s24, 1
      %p157 = por %p155, %p156
      %p159 = scmp.ne.s32.totalorder %s142, %s158
      %p160 = scmp.eq.s32.totalorder %s24, 0
      %p161 = por %p159, %p160
      %p162 = scmp.le.s32.totalorder 1, %s18
      %p163 = scmp.lt.s32.totalorder %s18, 3
      %p164 = pnand %p162, %p163
      %p165 = pneg %p164
      // Predicated region
      $region9: #{tpu_custom_call.1} parent=5 // pred_check
        _
      $region10: #{tpu_custom_call.1} parent=5 // pred_check_branch
        %167 = sbr.rel (%p164) target = $region12
      $region11: #{tpu_custom_call.1} parent=5 // pred_region
        %s168 = ssub.s32 %s18, 1
        // Predicated region
        $region13: #{tpu_custom_call.1} parent=11 // pred_check
          %p169 = pneg %p65
        $region14: #{tpu_custom_call.1} parent=11 // pred_check_branch
          %171 = sbr.rel (%p169) target = $region16
        $region15: #{tpu_custom_call.1} parent=11 // pred_region
          _
        $region16: #{tpu_custom_call.1} parent=11 // pred_fallthru
          _
        // Predicated region
        $region17: #{tpu_custom_call.1} parent=11 // pred_check
          %p172 = pneg %p86
        $region18: #{tpu_custom_call.1} parent=11 // pred_check_branch
          %174 = sbr.rel (%p172) target = $region20
        $region19: #{tpu_custom_call.1} parent=11 // pred_region
          _
        $region20: #{tpu_custom_call.1} parent=11 // pred_fallthru
          _
        // Predicated region
        $region21: #{tpu_custom_call.1} parent=11 // pred_check
          %p175 = pneg %p107
        $region22: #{tpu_custom_call.1} parent=11 // pred_check_branch
          %177 = sbr.rel (%p175) target = $region24
        $region23: #{tpu_custom_call.1} parent=11 // pred_region
          _
        $region24: #{tpu_custom_call.1} parent=11 // pred_fallthru
          _
        // Predicated region
        $region25: #{tpu_custom_call.1} parent=11 // pred_check
          %p178 = pneg %p128
        $region26: #{tpu_custom_call.1} parent=11 // pred_check_branch
          %180 = sbr.rel (%p178) target = $region28
        $region27: #{tpu_custom_call.1} parent=11 // pred_region
          %s182 = ssub.s32 2304, 2304
          %183 = vsyncadd [#allocation6], %s182
          %s184 = sshll.u32 [#allocation5], 4
          %s185 = int_to_ptr.vmem [resolvable:$true] %s184
          %190 = dma.hbm_to_vmem [thread:$0]  %s4, 2304, %s185, [#allocation6], 256, 256, 16
        $region28: #{tpu_custom_call.1} parent=11 // pred_fallthru
          _
      $region12: #{tpu_custom_call.1} parent=5 // pred_fallthru
        _
      %p191 = scmp.lt.s32.totalorder %s18, 2
      // Predicated region
      $region29: #{tpu_custom_call.1} parent=5 // pred_check
        %p192 = pneg %p191
      $region30: #{tpu_custom_call.1} parent=5 // pred_check_branch
        %194 = sbr.rel (%p192) target = $region32
      $region31: #{tpu_custom_call.1} parent=5 // pred_region
        // Predicated region
        $region33: #{tpu_custom_call.1} parent=31 // pred_check
          %p195 = pneg %p38
        $region34: #{tpu_custom_call.1} parent=31 // pred_check_branch
          %197 = sbr.rel (%p195) target = $region36
        $region35: #{tpu_custom_call.1} parent=31 // pred_region
          %s198 = sand.u32 %s28, 1
          %s199 = scalar_lea.sflag [#allocation3], %s198
          %s200 = sand.u32 %s28, 1
          %s201 = smul.addr %s200, 16
          %s202 = scalar_lea.vmem [#allocation2], %s201
          %s204 = ssub.s32 256, 256
          %205 = vsyncadd %s199, %s204
          %s206 = smul.addr %s18, 2
          %s207 = smul.addr %s206, 128
          %s208 = scalar_lea.hbm %s0, %s207
          %s210 = sshll.u32 %s202, 4
          %s211 = int_to_ptr.vmem [resolvable:$true] %s210
          %213 = dma.hbm_to_vmem [thread:$0]  %s208, 256, %s211, %s199
        $region36: #{tpu_custom_call.1} parent=31 // pred_fallthru
          _
      $region32: #{tpu_custom_call.1} parent=5 // pred_fallthru
        _
      %p214 = scmp.le.s32.totalorder 1, %s18
      %p215 = scmp.lt.s32.totalorder %s18, 3
      %p216 = pnand %p214, %p215
      %p217 = pneg %p216
      // Predicated region
      $region37: #{tpu_custom_call.1} parent=5 // pred_check
        _
      $region38: #{tpu_custom_call.1} parent=5 // pred_check_branch
        %219 = sbr.rel (%p216) target = $region40
      $region39: #{tpu_custom_call.1} parent=5 // pred_region
        %s220 = ssub.s32 %s18, 1
        %s221 = sand.u32 %s31, 1
        %s222 = scalar_lea.sflag [#allocation3], %s221
        %s223 = sand.u32 %s31, 1
        %s224 = smul.addr %s223, 16
        %s225 = scalar_lea.vmem [#allocation2], %s224
        // Predicated region
        $region41: #{tpu_custom_call.1} parent=39 // pred_check
          %p226 = pneg %p44
        $region42: #{tpu_custom_call.1} parent=39 // pred_check_branch
          %228 = sbr.rel (%p226) target = $region44
        $region43: #{tpu_custom_call.1} parent=39 // pred_region
          %229 = dma.done %s222, 256
        $region44: #{tpu_custom_call.1} parent=39 // pred_fallthru
          _
        // Predicated region
        $region45: #{tpu_custom_call.1} parent=39 // pred_check
          %p230 = pneg %p128
        $region46: #{tpu_custom_call.1} parent=39 // pred_check_branch
          %232 = sbr.rel (%p230) target = $region48
        $region47: #{tpu_custom_call.1} parent=39 // pred_region
          %233 = dma.done [#allocation6], 2304
        $region48: #{tpu_custom_call.1} parent=39 // pred_fallthru
          _
        %s234 = sand.u32 %s31, 1
        %s235 = scalar_lea.sflag [#allocation3], %s234
        %s236 = sand.u32 %s31, 1
        %s237 = smul.addr %s236, 16
        %s238 = scalar_lea.vmem [#allocation2], %s237
        %p239 = pneg %p44
        %p240 = pneg %p41
        %p241 = pneg %p65
        %p242 = pneg %p62
        %p243 = pneg %p86
        %p244 = pneg %p83
        %p245 = pneg %p107
        %p246 = pneg %p104
        %p247 = pneg %p128
        %p248 = pneg %p125
        %p249 = pneg %p154
        %p250 = pneg %p151
        %s251 = sand.u32 %s141, 1
        %s252 = scalar_lea.sflag [#allocation4], %s251
        %s253 = sand.u32 %s141, 1
        %s254 = smul.addr %s253, 16
        %s255 = scalar_lea.vmem [#allocation7], %s254
        %v257 = vld [vmem:[%s225] sm:$0xff]
        %v258 = vld [vmem:[%s225 + $0x8] sm:$0xff]
        %259 = vrot.lane.b32.xlu0 %v257, 17
        %v260 = vpop.permute.xlu0 %259
        %261 = vrot.lane.b32.xlu0 %v258, 17
        %v262 = vpop.permute.xlu0 %261
        %v263 = vlaneseq
        %v264 = vand.u32 %v263, 127
        %vm265 = vcmp.lt.s32.totalorder %v264, 17
        %v266 = vsel %vm265, %v260, %v262
        %v267 = vsel %vm265, %v262, %v260
        %268 = vrot.lane.b32.xlu0 %v257, 16
        %v269 = vpop.permute.xlu0 %268
        %270 = vrot.lane.b32.xlu0 %v258, 16
        %v271 = vpop.permute.xlu0 %270
        %vm272 = vcmp.lt.s32.totalorder %v264, 16
        %v273 = vsel %vm272, %v269, %v271
        %v274 = vsel %vm272, %v271, %v269
        %275 = vrot.lane.b32.xlu0 %v257, 15
        %v276 = vpop.permute.xlu0 %275
        %277 = vrot.lane.b32.xlu0 %v258, 15
        %v278 = vpop.permute.xlu0 %277
        %vm279 = vcmp.lt.s32.totalorder %v264, 15
        %v280 = vsel %vm279, %v276, %v278
        %v281 = vsel %vm279, %v278, %v276
        %282 = vrot.lane.b32.xlu0 %v257, 1
        %v283 = vpop.permute.xlu0 %282
        %284 = vrot.lane.b32.xlu0 %v258, 1
        %v285 = vpop.permute.xlu0 %284
        %vm286 = vcmp.lt.s32.totalorder %v264, 1
        %v287 = vsel %vm286, %v283, %v285
        %v288 = vsel %vm286, %v285, %v283
        %289 = vrot.lane.b32.xlu0 %v257, 127
        %v290 = vpop.permute.xlu0 %289
        %291 = vrot.lane.b32.xlu0 %v258, 127
        %v292 = vpop.permute.xlu0 %291
        %vm293 = vcmp.lt.s32.totalorder %v264, 127
        %v294 = vsel %vm293, %v290, %v292
        %v295 = vsel %vm293, %v292, %v290
        %296 = vrot.lane.b32.xlu0 %v257, 113
        %v297 = vpop.permute.xlu0 %296
        %298 = vrot.lane.b32.xlu0 %v258, 113
        %v299 = vpop.permute.xlu0 %298
        %vm300 = vcmp.lt.s32.totalorder %v264, 113
        %v301 = vsel %vm300, %v297, %v299
        %v302 = vsel %vm300, %v299, %v297
        %303 = vrot.lane.b32.xlu0 %v257, 112
        %v304 = vpop.permute.xlu0 %303
        %305 = vrot.lane.b32.xlu0 %v258, 112
        %v306 = vpop.permute.xlu0 %305
        %vm307 = vcmp.lt.s32.totalorder %v264, 112
        %v308 = vsel %vm307, %v304, %v306
        %v309 = vsel %vm307, %v306, %v304
        %310 = vrot.lane.b32.xlu0 %v257, 111
        %v311 = vpop.permute.xlu0 %310
        %312 = vrot.lane.b32.xlu0 %v258, 111
        %v313 = vpop.permute.xlu0 %312
        %vm314 = vcmp.lt.s32.totalorder %v264, 111
        %v315 = vsel %vm314, %v311, %v313
        %v316 = vsel %vm314, %v313, %v311
        %v317 = vld [vmem:[#allocation5] sm:$0xff]
        %v318 = vld [vmem:[#allocation5 + $0x8] sm:$0xff]
        %v319 = vld [vmem:[#allocation5 + $0x10] sm:$0xff]
        %v320 = vld [vmem:[#allocation5 + $0x18] sm:$0xff]
        %v321 = vld [vmem:[#allocation5 + $0x20] sm:$0xff]
        %v322 = vld [vmem:[#allocation5 + $0x28] sm:$0xff]
        %v323 = vld [vmem:[#allocation5 + $0x30] sm:$0xff]
        %v324 = vld [vmem:[#allocation5 + $0x38] sm:$0xff]
        %v325 = vld [vmem:[#allocation5 + $0x40] sm:$0xff]
        %v326 = vld [vmem:[#allocation5 + $0x48] sm:$0xff]
        %v327 = vld [vmem:[#allocation5 + $0x50] sm:$0xff]
        %v328 = vld [vmem:[#allocation5 + $0x58] sm:$0xff]
        %v329 = vld [vmem:[#allocation5 + $0x60] sm:$0xff]
        %v330 = vld [vmem:[#allocation5 + $0x68] sm:$0xff]
        %v331 = vld [vmem:[#allocation5 + $0x70] sm:$0xff]
        %v332 = vld [vmem:[#allocation5 + $0x78] sm:$0xff]
        %v333 = vld [vmem:[#allocation5 + $0x80] sm:$0xff]
        %v334 = vld [vmem:[#allocation5 + $0x88] sm:$0xff]
        %v335 = vmul.f32 %v267, %v317
        %v336 = vmul.f32 %v266, %v318
        %v337 = vmul.f32 %v274, %v319
        %v338 = vmul.f32 %v273, %v320
        %v339 = vmul.f32 %v281, %v321
        %v340 = vmul.f32 %v280, %v322
        %v341 = vmul.f32 %v288, %v323
        %v342 = vmul.f32 %v287, %v324
        %v343 = vmul.f32 %v257, %v325
        %v344 = vmul.f32 %v258, %v326
        %v345 = vmul.f32 %v294, %v327
        %v346 = vmul.f32 %v295, %v328
        %v347 = vmul.f32 %v301, %v329
        %v348 = vmul.f32 %v302, %v330
        %v349 = vmul.f32 %v308, %v331
        %v350 = vmul.f32 %v309, %v332
        %v351 = vmul.f32 %v315, %v333
        %v352 = vmul.f32 %v316, %v334
        %v353 = vpack.c.bf16 %v337, %v335
        %v354 = vpack.c.bf16 %v338, %v336
        %v355 = vpack.c.bf16 %v341, %v339
        %v356 = vpack.c.bf16 %v342, %v340
        %v357 = vpack.c.bf16 %v345, %v343
        %v358 = vpack.c.bf16 %v346, %v344
        %v359 = vpack.c.bf16 %v349, %v347
        %v360 = vpack.c.bf16 %v350, %v348
        %v361 = vpack.c.bf16 %v351, %v351
        %v362 = vpack.c.bf16 %v352, %v352
        %v363 = vld [vmem:[%s1] sm:$0xf]
        %v364 = vld [vmem:[%s1 + $0x4] sm:$0xf]
        %v367 = vunpack.c.l.b16 %v363
        %v368 = vunpack.c.l.b16 %v364
        %v369 = vpack.c.b16 %v368, %v367
        %vm370 = vcmask 588800
        %v372 = vsel %vm370, %v369, 0
        %vm374 = vcmask 1043456
        %v376 = vsel %vm374, %v361, 0
        %v379 = vsel %vm374, %v362, 0
        %381 = vmatprep.subr.bf16.mxu0 %v354
        %382 = vmatpush1.bf16.msra.mxu0 %v353
        %383 = vmatprep.subr.bf16.mxu0 %v356
        %384 = vmatpush1.bf16.msra.mxu0 %v355
        %385 = vmatprep.subr.bf16.mxu0 %v358
        %386 = vmatpush1.bf16.msra.mxu0 %v357
        %387 = vmatprep.subr.bf16.mxu0 %v360
        %388 = vmatpush1.bf16.msra.mxu0 %v359
        %389 = vmatprep.subr.bf16.mxu0 %v379
        %390 = vmatpush1.bf16.msra.mxu0 %v376
        %391 = vmatprep.subr.bf16.mxu0 0
        %392 = vmatpush1.bf16.msra.mxu0 0
        %393 = vmatprep.subr.bf16.mxu0 0
        %394 = vmatpush1.bf16.msra.mxu0 0
        %395 = vmatprep.subr.bf16.mxu0 0
        %396 = vmatpush1.bf16.msra.mxu0 0
        %397 = vmatprep.subr.bf16.mxu0 0
        %398 = vmatpush1.bf16.msra.mxu0 0
        %399 = vmatprep.subr.bf16.mxu0 0
        %400 = vmatpush1.bf16.msra.mxu0 0
        %401 = vmatprep.subr.bf16.mxu0 0
        %402 = vmatpush1.bf16.msra.mxu0 0
        %403 = vmatprep.subr.bf16.mxu0 0
        %404 = vmatpush1.bf16.msra.mxu0 0
        %405 = vmatprep.subr.bf16.mxu0 0
        %406 = vmatpush1.bf16.msra.mxu0 0
        %407 = vmatprep.subr.bf16.mxu0 0
        %408 = vmatpush1.bf16.msra.mxu0 0
        %409 = vmatprep.subr.bf16.mxu0 0
        %410 = vmatpush1.bf16.msra.mxu0 0
        %411 = vmatprep.subr.bf16.mxu0 0
        %412 = vmatpush1.bf16.msra.mxu0 0
        %413 = vmatprep.mubr.bf16.mxu0 0
        %414 = vmatmul.mubr.bf16.gmra.mrb[0].mxu0 %v372
        %v415 = vpop.f32.mrb[0].mxu0
        %v416 = vadd.f32 0.0, %v415
        %v417 = vpop.f32.mrb[0].mxu0
        %v418 = vadd.f32 0.0, %v417
        %v419 = vpop.f32.mrb[0].mxu0
        %v420 = vadd.f32 0.0, %v419
        %v421 = vpop.f32.mrb[0].mxu0
        %v422 = vadd.f32 0.0, %v421
        %423 = vdwg.mxu0
        %v424 = vld [vmem:[%s2] sm:$0xff]
        %426 = vset.pattern.permute.xlu0 0
        %427 = vperm.xlu0 %426, %v424
        %v428 = vpop.permute.xlu0 %427
        %v430 = vadd.f32 %v420, %v428
        %v431 = vadd.f32 %v422, %v428
        %v432 = vxor.u32 %v430, 2147483648
        %v433 = vxor.u32 %v431, 2147483648
        %v434 = vmul.f32 %v432, 1.442695
        %v435 = vpow.pop %v434
        %v436 = vmul.f32 %v433, 1.442695
        %v437 = vpow.pop %v436
        %v438 = vadd.f32 %v435, 1.0
        %v439 = vadd.f32 %v437, 1.0
        %v440 = vrcp.pop %v438
        %v441 = vmul.f32 1.0, %v440
        %v442 = vrcp.pop %v439
        %v443 = vmul.f32 1.0, %v442
        %v444 = vmul.f32 %v416, %v441
        %v445 = vmul.f32 %v418, %v443
        %v446 = vld [vmem:[%s3] sm:$0xf]
        %447 = vrot.lane.b32.xlu0 %v444, 17
        %v448 = vpop.permute.xlu0 %447
        %449 = vrot.lane.b32.xlu0 %v445, 17
        %v450 = vpop.permute.xlu0 %449
        %v451 = vsel %vm265, %v448, %v450
        %v452 = vsel %vm265, %v450, %v448
        %453 = vrot.lane.b32.xlu0 %v444, 16
        %v454 = vpop.permute.xlu0 %453
        %455 = vrot.lane.b32.xlu0 %v445, 16
        %v456 = vpop.permute.xlu0 %455
        %v457 = vsel %vm272, %v454, %v456
        %v458 = vsel %vm272, %v456, %v454
        %459 = vrot.lane.b32.xlu0 %v444, 15
        %v460 = vpop.permute.xlu0 %459
        %461 = vrot.lane.b32.xlu0 %v445, 15
        %v462 = vpop.permute.xlu0 %461
        %v463 = vsel %vm279, %v460, %v462
        %v464 = vsel %vm279, %v462, %v460
        %465 = vrot.lane.b32.xlu0 %v444, 1
        %v466 = vpop.permute.xlu0 %465
        %467 = vrot.lane.b32.xlu0 %v445, 1
        %v468 = vpop.permute.xlu0 %467
        %v469 = vsel %vm286, %v466, %v468
        %v470 = vsel %vm286, %v468, %v466
        %471 = vrot.lane.b32.xlu0 %v444, 127
        %v472 = vpop.permute.xlu0 %471
        %473 = vrot.lane.b32.xlu0 %v445, 127
        %v474 = vpop.permute.xlu0 %473
        %v475 = vsel %vm293, %v472, %v474
        %v476 = vsel %vm293, %v474, %v472
        %477 = vrot.lane.b32.xlu0 %v444, 113
        %v478 = vpop.permute.xlu0 %477
        %479 = vrot.lane.b32.xlu0 %v445, 113
        %v480 = vpop.permute.xlu0 %479
        %v481 = vsel %vm300, %v478, %v480
        %v482 = vsel %vm300, %v480, %v478
        %483 = vrot.lane.b32.xlu0 %v444, 112
        %v484 = vpop.permute.xlu0 %483
        %485 = vrot.lane.b32.xlu0 %v445, 112
        %v486 = vpop.permute.xlu0 %485
        %v487 = vsel %vm307, %v484, %v486
        %v488 = vsel %vm307, %v486, %v484
        %489 = vrot.lane.b32.xlu0 %v444, 111
        %v490 = vpop.permute.xlu0 %489
        %491 = vrot.lane.b32.xlu0 %v445, 111
        %v492 = vpop.permute.xlu0 %491
        %v493 = vsel %vm314, %v490, %v492
        %v494 = vsel %vm314, %v492, %v490
        %v495 = vmul.f32 %v452, %v317
        %v496 = vmul.f32 %v451, %v318
        %v497 = vmul.f32 %v458, %v319
        %v498 = vmul.f32 %v457, %v320
        %v499 = vmul.f32 %v464, %v321
        %v500 = vmul.f32 %v463, %v322
        %v501 = vmul.f32 %v470, %v323
        %v502 = vmul.f32 %v469, %v324
        %v503 = vmul.f32 %v444, %v325
        %v504 = vmul.f32 %v445, %v326
        %v505 = vmul.f32 %v475, %v327
        %v506 = vmul.f32 %v476, %v328
        %v507 = vmul.f32 %v481, %v329
        %v508 = vmul.f32 %v482, %v330
        %v509 = vmul.f32 %v487, %v331
        %v510 = vmul.f32 %v488, %v332
        %v511 = vmul.f32 %v493, %v333
        %v512 = vmul.f32 %v494, %v334
        %v513 = vpack.c.bf16 %v497, %v495
        %v514 = vpack.c.bf16 %v498, %v496
        %v515 = vpack.c.bf16 %v501, %v499
        %v516 = vpack.c.bf16 %v502, %v500
        %v517 = vpack.c.bf16 %v505, %v503
        %v518 = vpack.c.bf16 %v506, %v504
        %v519 = vpack.c.bf16 %v509, %v507
        %v520 = vpack.c.bf16 %v510, %v508
        %v521 = vpack.c.bf16 %v511, %v511
        %v522 = vpack.c.bf16 %v512, %v512
        %v524 = vsel %vm370, %v446, 0
        %v527 = vsel %vm374, %v521, 0
        %v530 = vsel %vm374, %v522, 0
        %532 = vmatprep.subr.bf16.mxu0 %v514
        %533 = vmatpush1.bf16.msra.mxu0 %v513
        %534 = vmatprep.subr.bf16.mxu0 %v516
        %535 = vmatpush1.bf16.msra.mxu0 %v515
        %536 = vmatprep.subr.bf16.mxu0 %v518
        %537 = vmatpush1.bf16.msra.mxu0 %v517
        %538 = vmatprep.subr.bf16.mxu0 %v520
        %539 = vmatpush1.bf16.msra.mxu0 %v519
        %540 = vmatprep.subr.bf16.mxu0 %v530
        %541 = vmatpush1.bf16.msra.mxu0 %v527
        %542 = vmatprep.subr.bf16.mxu0 0
        %543 = vmatpush1.bf16.msra.mxu0 0
        %544 = vmatprep.subr.bf16.mxu0 0
        %545 = vmatpush1.bf16.msra.mxu0 0
        %546 = vmatprep.subr.bf16.mxu0 0
        %547 = vmatpush1.bf16.msra.mxu0 0
        %548 = vmatprep.subr.bf16.mxu0 0
        %549 = vmatpush1.bf16.msra.mxu0 0
        %550 = vmatprep.subr.bf16.mxu0 0
        %551 = vmatpush1.bf16.msra.mxu0 0
        %552 = vmatprep.subr.bf16.mxu0 0
        %553 = vmatpush1.bf16.msra.mxu0 0
        %554 = vmatprep.subr.bf16.mxu0 0
        %555 = vmatpush1.bf16.msra.mxu0 0
        %556 = vmatprep.subr.bf16.mxu0 0
        %557 = vmatpush1.bf16.msra.mxu0 0
        %558 = vmatprep.subr.bf16.mxu0 0
        %559 = vmatpush1.bf16.msra.mxu0 0
        %560 = vmatprep.subr.bf16.mxu0 0
        %561 = vmatpush1.bf16.msra.mxu0 0
        %562 = vmatprep.subr.bf16.mxu0 0
        %563 = vmatpush1.bf16.msra.mxu0 0
        %564 = vmatprep.mubr.bf16.mxu0 0
        %565 = vmatmul.mubr.bf16.gmra.mrb[0].mxu0 %v524
        %v566 = vpop.f32.mrb[0].mxu0
        %v567 = vadd.f32 0.0, %v566
        %v568 = vpop.f32.mrb[0].mxu0
        %v569 = vadd.f32 0.0, %v568
        %v570 = vpop.f32.mrb[0].mxu0
        %v571 = vpop.f32.mrb[0].mxu0
        %572 = vdwg.mxu0
        %573 = vst [vmem:[%s255] sm:$0xff] %v567
        %574 = vst [vmem:[%s255 + $0x8] sm:$0xff] %v569
        %s575 = sand.u32 %s141, 1
        %s576 = scalar_lea.sflag [#allocation4], %s575
        %s577 = sand.u32 %s141, 1
        %s578 = smul.addr %s577, 16
        %s579 = scalar_lea.vmem [#allocation7], %s578
        // Predicated region
        $region49: #{tpu_custom_call.1} parent=39 // pred_check
          %p580 = pneg %p151
        $region50: #{tpu_custom_call.1} parent=39 // pred_check_branch
          %582 = sbr.rel (%p580) target = $region52
        $region51: #{tpu_custom_call.1} parent=39 // pred_region
          %s584 = ssub.s32 256, 256
          %585 = vsyncadd %s576, %s584
          %s586 = smul.addr %s23, 2
          %s587 = smul.addr %s586, 128
          %s588 = scalar_lea.hbm %s5, %s587
          %s590 = sshll.u32 %s579, 4
          %s591 = int_to_ptr.vmem [resolvable:$true] %s590
          %593 = dma.vmem_to_hbm [thread:$0]  %s591, 256, %s588, %s576
        $region52: #{tpu_custom_call.1} parent=39 // pred_fallthru
          _
      $region40: #{tpu_custom_call.1} parent=5 // pred_fallthru
        _
      %p594 = scmp.le.s32.totalorder 2, %s18
      // Predicated region
      $region53: #{tpu_custom_call.1} parent=5 // pred_check
        %p595 = pneg %p594
      $region54: #{tpu_custom_call.1} parent=5 // pred_check_branch
        %597 = sbr.rel (%p595) target = $region56
      $region55: #{tpu_custom_call.1} parent=5 // pred_region
        %s598 = ssub.s32 %s18, 2
        // Predicated region
        $region57: #{tpu_custom_call.1} parent=55 // pred_check
          %p599 = pneg %p157
        $region58: #{tpu_custom_call.1} parent=55 // pred_check_branch
          %601 = sbr.rel (%p599) target = $region60
        $region59: #{tpu_custom_call.1} parent=55 // pred_region
          %s602 = sand.u32 %s142, 1
          %s603 = scalar_lea.sflag [#allocation4], %s602
          %s604 = sand.u32 %s142, 1
          %s605 = smul.addr %s604, 16
          %s606 = scalar_lea.vmem [#allocation7], %s605
          %607 = dma.done %s603, 256
        $region60: #{tpu_custom_call.1} parent=55 // pred_fallthru
          _
      $region56: #{tpu_custom_call.1} parent=5 // pred_fallthru
        _
    $region6: #{tpu_custom_call.1} parent=1 // loop_footer
      %s22 = sadd.s32 1, %s18
    $region7: #{tpu_custom_call.1} parent=1 // loop_footer_branch
      %17 = sbr.rel target = $region3
    $region8: #{tpu_custom_call.1} parent=1 // loop_exit
      _
    %608 = vsyncpa [#allocation3], 1
    %s609 = scalar_lea.sflag [#allocation3], 1
    %610 = vsyncpa %s609, 1
    %611 = vsyncpa [#allocation6], 1
    %612 = vsyncpa [#allocation4], 1
    %s613 = scalar_lea.sflag [#allocation4], 1
    %614 = vsyncpa %s613, 1

</llo_original>
